<compile_context>
chip_gen: v7x
topology: tpu7x:2x2x1
jax: 0.10.0
libtpu: 0.0.40
codegen_flags: <defaults>
</compile_context>

<pallas_src>
import functools

import jax
import jax.numpy as jnp
from jax import lax
from jax.experimental import pallas as pl
from jax.experimental.pallas import tpu as pltpu


def _round_up(x, m):
    return (x + m - 1) // m * m


def _vmem_capacity_bytes():
    try:
        return int(pltpu.get_tpu_info().vmem_capacity_bytes)
    except Exception:
        return 128 * 1024 * 1024  # v5e/v6e default; conservative fallback


def _pick_tiles(n, c):
    """Choose (tn, num_tiles, vmem_limit_bytes).

    Blocks are (tn, C) with tn a multiple of 8 and last dim == full C
    (always a legal TPU block).  Budget per block: ~2 MiB on v7x (64 MiB
    VMEM per TensorCore), ~4 MiB on v5e/v6e (128 MiB VMEM).
    """
    vmem_cap = _vmem_capacity_bytes()
    block_budget = (2 << 20) if vmem_cap <= (64 << 20) else (4 << 20)
    row_bytes = _round_up(c, 128) * 4          # physical lanes, f32 compute
    tn_cap = max(8, (block_budget // row_bytes) // 8 * 8)
    tn = min(2048, tn_cap)
    if n <= tn:
        # Small batch: split into (up to) two tiles so a "parallel" grid axis
        # can use both v7x TensorCores instead of a single-step grid.
        tn = max(8, _round_up(pl.cdiv(n, 2), 8))
    num_tiles = pl.cdiv(n, tn)
    block_bytes = tn * row_bytes
    # ~3 (TN,C) blocks (x, e, poe) double-buffered, plus slack for small
    # operands and scratch; stay well under the physical capacity.
    vmem_limit = min(int(0.75 * vmem_cap), max(32 << 20, 8 * block_bytes))
    return tn, num_tiles, vmem_limit


# ----------------------------------------------------------------------------
# Kernels
# ----------------------------------------------------------------------------
def _poe_train_kernel(*refs, alpha, beta, mix, use_corrs, n_valid, tn):
    if use_corrs:
        x_ref, e_ref, t_ref, c_ref, row_loss_ref, poe_ref = refs
    else:
        x_ref, e_ref, t_ref, row_loss_ref, poe_ref = refs
        c_ref = None

    i = pl.program_id(0)
    x = x_ref[...].astype(jnp.float32)            # (TN, C)
    e = e_ref[...].astype(jnp.float32)            # (TN, C)
    t = t_ref[...]                                # (TN, 1) int32

    tn_rows, c = x.shape
    class_ids = lax.broadcasted_iota(jnp.int32, (tn_rows, c), 1)
    tmask = class_ids == t                        # target one-hot (TN, C)

    # Stabilized logsumexp of x and e (one pass each).
    mx = jnp.max(x, axis=-1, keepdims=True)
    lse_x = jnp.log(jnp.sum(jnp.exp(x - mx), axis=-1, keepdims=True)) + mx
    me = jnp.max(e, axis=-1, keepdims=True)
    lse_e = jnp.log(jnp.sum(jnp.exp(e - me), axis=-1, keepdims=True)) + me

    # Combined logits; poe_logits = log_softmax(x) + log_softmax(e)
    #                             = s - (lse_x + lse_e).
    s = x + e
    ms = jnp.max(s, axis=-1, keepdims=True)
    lse_s = jnp.log(jnp.sum(jnp.exp(s - ms), axis=-1, keepdims=True)) + ms
    poe_ref[...] = (s - (lse_x + lse_e)).astype(poe_ref.dtype)

    # Target picks via masked lane-sums on already-live tensors.
    xt = jnp.sum(jnp.where(tmask, x, 0.0), axis=-1, keepdims=True)
    st = jnp.sum(jnp.where(tmask, s, 0.0), axis=-1, keepdims=True)

    orig_loss = lse_x - xt                        # CE(inputs, target)
    # CE(poe) = lse(poe) - poe[t] = (lse_s - lse_x - lse_e) - (s[t] - lse_x - lse_e)
    poe_losses = lse_s - st                       # CE(poe_logits, target)

    if use_corrs:
        corrs = c_ref[...].astype(jnp.float32)    # (TN, 1)
        decay = jnp.exp(-beta * poe_losses)
        if mix in (0, 2):
            m_corrs = jnp.exp(decay * jnp.log(corrs + 1e-10))   # (corrs+eps)**decay
        else:
            m_corrs = 1.0 - (1.0 - corrs) * decay
        if mix in (0, 1):
            losses = poe_losses * m_corrs + alpha * (1.0 - m_corrs) * orig_loss
        else:
            losses = (poe_losses + alpha * orig_loss) * m_corrs \
                     + (1.0 - m_corrs) * orig_loss
    else:
        losses = poe_losses + alpha * orig_loss

    # Mask ragged batch-tail rows (select is NaN-safe against tail garbage).
    row_ids = i * tn + lax.broadcasted_iota(jnp.int32, (tn_rows, 1), 0)
    valid = row_ids < n_valid
    row_loss_ref[...] = jnp.where(valid, losses, 0.0)


def _ce_eval_kernel(x_ref, t_ref, row_loss_ref, *, n_valid, tn):
    i = pl.program_id(0)
    x = x_ref[...].astype(jnp.float32)
    t = t_ref[...]
    tn_rows, c = x.shape
    class_ids = lax.broadcasted_iota(jnp.int32, (tn_rows, c), 1)
    tmask = class_ids == t
    mx = jnp.max(x, axis=-1, keepdims=True)
    lse = jnp.log(jnp.sum(jnp.exp(x - mx), axis=-1, keepdims=True)) + mx
    xt = jnp.sum(jnp.where(tmask, x, 0.0), axis=-1, keepdims=True)
    losses = lse - xt
    row_ids = i * tn + lax.broadcasted_iota(jnp.int32, (tn_rows, 1), 0)
    valid = row_ids < n_valid
    row_loss_ref[...] = jnp.where(valid, losses, 0.0)


# ----------------------------------------------------------------------------
# Wrapper
# ----------------------------------------------------------------------------
def product_of_experts_loss(inputs, expert_input, target, corrs=None, *,
                            alpha=1.0, beta=1.0, mcorr_mix_type=0,
                            training=True):
    """JAX/Pallas port of ProductOfExpertsLoss.forward.

    inputs, expert_input: (N, C) raw logits.  target: (N,) int labels.
    corrs: optional (N,) float.  Returns (mean_loss, logits) like PyTorch.
    """
    n, c = inputs.shape
    tn, num_tiles, vmem_limit = _pick_tiles(n, c)
    t_col = target.astype(jnp.int32).reshape(n, 1)

    cparams = pltpu.CompilerParams(dimension_semantics=("parallel",),
                                   vmem_limit_bytes=vmem_limit)

    if not training:
        kernel = functools.partial(_ce_eval_kernel, n_valid=n, tn=tn)
        row_losses = pl.pallas_call(
            kernel,
            out_shape=jax.ShapeDtypeStruct((n, 1), jnp.float32),
            grid=(num_tiles,),
            in_specs=[pl.BlockSpec((tn, c), lambda i: (i, 0)),
                      pl.BlockSpec((tn, 1), lambda i: (i, 0))],
            out_specs=pl.BlockSpec((tn, 1), lambda i: (i, 0)),
            compiler_params=cparams,
        )(inputs, t_col)
        loss = jnp.sum(row_losses) / n
        # Eval returns the original (unnormalized) logits; no kernel echo.
        return loss, inputs

    assert expert_input is not None, "During training, expert_input must not be None"
    mix = int(mcorr_mix_type)
    if mix not in (0, 1, 2, 3):
        raise ValueError(f"unknown mcorr_mix_type={mcorr_mix_type}")

    use_corrs = corrs is not None
    operands = [inputs, expert_input, t_col]
    in_specs = [pl.BlockSpec((tn, c), lambda i: (i, 0)),
                pl.BlockSpec((tn, c), lambda i: (i, 0)),
                pl.BlockSpec((tn, 1), lambda i: (i, 0))]
    if use_corrs:
        operands.append(corrs.astype(jnp.float32).reshape(n, 1))
        in_specs.append(pl.BlockSpec((tn, 1), lambda i: (i, 0)))

    kernel = functools.partial(
        _poe_train_kernel, alpha=float(alpha), beta=float(beta),
        mix=mix, use_corrs=use_corrs, n_valid=n, tn=tn)

    row_losses, poe_logits = pl.pallas_call(
        kernel,
        out_shape=(jax.ShapeDtypeStruct((n, 1), jnp.float32),
                   jax.ShapeDtypeStruct((n, c), inputs.dtype)),
        grid=(num_tiles,),
        in_specs=in_specs,
        out_specs=(pl.BlockSpec((tn, 1), lambda i: (i, 0)),
                   pl.BlockSpec((tn, c), lambda i: (i, 0))),
        compiler_params=cparams,
    )(*operands)

    loss = jnp.sum(row_losses) / n
    return loss, poe_logits


# ----------------------------------------------------------------------------
# Pure-JAX reference (mirror of the PyTorch forward) for verification.
# ----------------------------------------------------------------------------
def _reference(inputs, expert_input, target, corrs, alpha, beta, mix):
    lsm = jax.nn.log_softmax

    def ce(z):
        return -jnp.take_along_axis(lsm(z, axis=-1), target[:, None], axis=-1)[:, 0]

    orig = ce(inputs)
    poe_logits = lsm(inputs, axis=-1) + lsm(expert_input, axis=-1)
    poe = ce(poe_logits)
    if corrs is None:
        losses = poe + alpha * orig
    else:
        decay = jnp.exp(-beta * poe)
        if mix == 0:
            m = (corrs + 1e-10) ** decay
            losses = poe * m + alpha * (1 - m) * orig
        elif mix == 1:
            m = 1.0 - (1.0 - corrs) * decay
            losses = poe * m + alpha * (1 - m) * orig
        elif mix == 2:
            m = (corrs + 1e-10) ** decay
            losses = (poe + alpha * orig) * m + (1 - m) * orig
        else:
            m = 1.0 - (1.0 - corrs) * decay
            losses = (poe + alpha * orig) * m + (1 - m) * orig
    return jnp.mean(losses), poe_logits


if __name__ == "__main__":
    key = jax.random.PRNGKey(0)
    alpha, beta = 1.0, 1.0
    ok = True

    # Case 1: tiny single-tile shape.
    # Case 2: ragged multi-tile shape (45 rows -> 2 tiles of 24, C=40 unaligned).
    for (N, C) in ((8, 32), (45, 40)):
        k1, k2, k3, k4, key = jax.random.split(key, 5)
        inputs = jax.random.normal(k1, (N, C), jnp.float32)
        expert = jax.random.normal(k2, (N, C), jnp.float32)
        target = jax.random.randint(k3, (N,), 0, C, jnp.int32)
        corrs = jax.random.uniform(k4, (N,), jnp.float32)

        for mix in (0, 1, 2, 3):
            loss, poe_logits = product_of_experts_loss(
                inputs, expert, target, corrs,
                alpha=alpha, beta=beta, mcorr_mix_type=mix, training=True)
            jax.block_until_ready((loss, poe_logits))
            ref_loss, ref_poe = _reference(inputs, expert, target, corrs,
                                           alpha, beta, mix)
            ok &= bool(jnp.allclose(loss, ref_loss, atol=1e-4, rtol=1e-4))
            ok &= bool(jnp.allclose(poe_logits, ref_poe, atol=1e-4, rtol=1e-4))

        # corrs=None path
        loss, poe_logits = product_of_experts_loss(
            inputs, expert, target, None, alpha=alpha, beta=beta, training=True)
        jax.block_until_ready((loss, poe_logits))
        ref_loss, ref_poe = _reference(inputs, expert, target, None,
                                       alpha, beta, 0)
        ok &= bool(jnp.allclose(loss, ref_loss, atol=1e-4, rtol=1e-4))
        ok &= bool(jnp.allclose(poe_logits, ref_poe, atol=1e-4, rtol=1e-4))

        # eval path
        eval_loss, eval_out = product_of_experts_loss(
            inputs, None, target, None, training=False)
        jax.block_until_ready((eval_loss, eval_out))
        ref_eval = jnp.mean(-jnp.take_along_axis(
            jax.nn.log_softmax(inputs, axis=-1), target[:, None], axis=-1))
        ok &= bool(jnp.allclose(eval_loss, ref_eval, atol=1e-4, rtol=1e-4))
        ok &= bool(jnp.allclose(eval_out, inputs))

    if ok:
        print("KERNEL_OK")
    else:
        print("KERNEL_MISMATCH")
</pallas_src>

<mosaic_0001>
module attributes {stable_mosaic.version = 11 : i64} {
  func.func @_poe_train_kernel(%arg0: i32, %arg1: memref<8x32xf32, #tpu.memory_space<vmem>>, %arg2: memref<8x32xf32, #tpu.memory_space<vmem>>, %arg3: memref<8x1xi32, #tpu.memory_space<vmem>>, %arg4: memref<8x1xf32, #tpu.memory_space<vmem>>, %arg5: memref<8x1xf32, #tpu.memory_space<vmem>>, %arg6: memref<8x32xf32, #tpu.memory_space<vmem>>) attributes {dimension_semantics = [#tpu.dimension_semantics<parallel>], iteration_bounds = array<i64: 1>, scalar_prefetch = 0 : i64, scratch_operands = 0 : i64, tpu.core_type = #tpu.core_type<tc>, window_params = [{transform_indices = @transform_0, window_bounds = array<i64: 8, 32>}, {transform_indices = @transform_1, window_bounds = array<i64: 8, 32>}, {transform_indices = @transform_2, window_bounds = array<i64: 8, 1>}, {transform_indices = @transform_3, window_bounds = array<i64: 8, 1>}, {transform_indices = @transform_4, window_bounds = array<i64: 8, 1>}, {transform_indices = @transform_5, window_bounds = array<i64: 8, 32>}]} {
    %c0 = arith.constant 0 : index
    %c0_0 = arith.constant 0 : index
    %0 = vector.load %arg1[%c0, %c0_0] : memref<8x32xf32, #tpu.memory_space<vmem>>, vector<8x32xf32>
    %c0_1 = arith.constant 0 : index
    %c0_2 = arith.constant 0 : index
    %1 = vector.load %arg2[%c0_1, %c0_2] : memref<8x32xf32, #tpu.memory_space<vmem>>, vector<8x32xf32>
    %c0_3 = arith.constant 0 : index
    %c0_4 = arith.constant 0 : index
    %2 = vector.load %arg3[%c0_3, %c0_4] : memref<8x1xi32, #tpu.memory_space<vmem>>, vector<8x1xi32>
    %3 = tpu.iota {dimensions = array<i32: 1>} : vector<8x32xi32>
    %4 = vector.broadcast %2 : vector<8x1xi32> to vector<8x32xi32>
    %5 = arith.cmpi eq, %3, %4 : vector<8x32xi32>
    %cst = arith.constant dense<0xFF800000> : vector<8xf32>
    %6 = vector.multi_reduction <maximumf>, %0, %cst [1] : vector<8x32xf32> to vector<8xf32>
    %7 = vector.shape_cast %6 : vector<8xf32> to vector<8x1xf32>
    %8 = vector.broadcast %7 : vector<8x1xf32> to vector<8x32xf32>
    %9 = arith.subf %0, %8 : vector<8x32xf32>
    %10 = math.exp %9 : vector<8x32xf32>
    %cst_5 = arith.constant dense<0.000000e+00> : vector<8xf32>
    %11 = vector.multi_reduction <add>, %10, %cst_5 [1] : vector<8x32xf32> to vector<8xf32>
    %12 = vector.shape_cast %11 : vector<8xf32> to vector<8x1xf32>
    %13 = math.log %12 : vector<8x1xf32>
    %14 = arith.addf %13, %7 : vector<8x1xf32>
    %cst_6 = arith.constant dense<0xFF800000> : vector<8xf32>
    %15 = vector.multi_reduction <maximumf>, %1, %cst_6 [1] : vector<8x32xf32> to vector<8xf32>
    %16 = vector.shape_cast %15 : vector<8xf32> to vector<8x1xf32>
    %17 = vector.broadcast %16 : vector<8x1xf32> to vector<8x32xf32>
    %18 = arith.subf %1, %17 : vector<8x32xf32>
    %19 = math.exp %18 : vector<8x32xf32>
    %cst_7 = arith.constant dense<0.000000e+00> : vector<8xf32>
    %20 = vector.multi_reduction <add>, %19, %cst_7 [1] : vector<8x32xf32> to vector<8xf32>
    %21 = vector.shape_cast %20 : vector<8xf32> to vector<8x1xf32>
    %22 = math.log %21 : vector<8x1xf32>
    %23 = arith.addf %22, %16 : vector<8x1xf32>
    %24 = arith.addf %0, %1 : vector<8x32xf32>
    %cst_8 = arith.constant dense<0xFF800000> : vector<8xf32>
    %25 = vector.multi_reduction <maximumf>, %24, %cst_8 [1] : vector<8x32xf32> to vector<8xf32>
    %26 = vector.shape_cast %25 : vector<8xf32> to vector<8x1xf32>
    %27 = vector.broadcast %26 : vector<8x1xf32> to vector<8x32xf32>
    %28 = arith.subf %24, %27 : vector<8x32xf32>
    %29 = math.exp %28 : vector<8x32xf32>
    %cst_9 = arith.constant dense<0.000000e+00> : vector<8xf32>
    %30 = vector.multi_reduction <add>, %29, %cst_9 [1] : vector<8x32xf32> to vector<8xf32>
    %31 = vector.shape_cast %30 : vector<8xf32> to vector<8x1xf32>
    %32 = math.log %31 : vector<8x1xf32>
    %33 = arith.addf %32, %26 : vector<8x1xf32>
    %34 = arith.addf %14, %23 : vector<8x1xf32>
    %35 = vector.broadcast %34 : vector<8x1xf32> to vector<8x32xf32>
    %36 = arith.subf %24, %35 : vector<8x32xf32>
    %c0_10 = arith.constant 0 : index
    %c0_11 = arith.constant 0 : index
    %37 = vector.load %arg6[%c0_10, %c0_11] : memref<8x32xf32, #tpu.memory_space<vmem>>, vector<8x32xf32>
    tpu.vector_store %arg6[%c0_10, %c0_11], %36 {strides = array<i32>} : memref<8x32xf32, #tpu.memory_space<vmem>>, vector<8x32xf32>,
    %cst_12 = arith.constant 0.000000e+00 : f32
    %38 = vector.broadcast %cst_12 : f32 to vector<8x32xf32>
    %39 = arith.select %5, %0, %38 : vector<8x32xi1>, vector<8x32xf32>
    %cst_13 = arith.constant dense<0.000000e+00> : vector<8xf32>
    %40 = vector.multi_reduction <add>, %39, %cst_13 [1] : vector<8x32xf32> to vector<8xf32>
    %41 = vector.shape_cast %40 : vector<8xf32> to vector<8x1xf32>
    %cst_14 = arith.constant 0.000000e+00 : f32
    %42 = vector.broadcast %cst_14 : f32 to vector<8x32xf32>
    %43 = arith.select %5, %24, %42 : vector<8x32xi1>, vector<8x32xf32>
    %cst_15 = arith.constant dense<0.000000e+00> : vector<8xf32>
    %44 = vector.multi_reduction <add>, %43, %cst_15 [1] : vector<8x32xf32> to vector<8xf32>
    %45 = vector.shape_cast %44 : vector<8xf32> to vector<8x1xf32>
    %46 = arith.subf %14, %41 : vector<8x1xf32>
    %47 = arith.subf %33, %45 : vector<8x1xf32>
    %c0_16 = arith.constant 0 : index
    %c0_17 = arith.constant 0 : index
    %48 = vector.load %arg4[%c0_16, %c0_17] : memref<8x1xf32, #tpu.memory_space<vmem>>, vector<8x1xf32>
    %cst_18 = arith.constant -1.000000e+00 : f32
    %49 = vector.broadcast %cst_18 : f32 to vector<8x1xf32>
    %50 = arith.mulf %49, %47 : vector<8x1xf32>
    %51 = math.exp %50 : vector<8x1xf32>
    %cst_19 = arith.constant 1.000000e-10 : f32
    %52 = vector.broadcast %cst_19 : f32 to vector<8x1xf32>
    %53 = arith.addf %48, %52 : vector<8x1xf32>
    %54 = math.log %53 : vector<8x1xf32>
    %55 = arith.mulf %51, %54 : vector<8x1xf32>
    %56 = math.exp %55 : vector<8x1xf32>
    %57 = arith.mulf %47, %56 : vector<8x1xf32>
    %cst_20 = arith.constant 1.000000e+00 : f32
    %58 = vector.broadcast %cst_20 : f32 to vector<8x1xf32>
    %59 = arith.subf %58, %56 : vector<8x1xf32>
    %cst_21 = arith.constant 1.000000e+00 : f32
    %60 = vector.broadcast %cst_21 : f32 to vector<8x1xf32>
    %61 = arith.mulf %60, %59 : vector<8x1xf32>
    %62 = arith.mulf %61, %46 : vector<8x1xf32>
    %63 = arith.addf %57, %62 : vector<8x1xf32>
    %c8_i32 = arith.constant 8 : i32
    %64 = arith.muli %arg0, %c8_i32 : i32
    %65 = tpu.iota {dimensions = array<i32: 0>} : vector<8x1xi32>
    %66 = vector.broadcast %64 : i32 to vector<8x1xi32>
    %67 = arith.addi %66, %65 : vector<8x1xi32>
    %c8_i32_22 = arith.constant 8 : i32
    %68 = vector.broadcast %c8_i32_22 : i32 to vector<8x1xi32>
    %69 = arith.cmpi slt, %67, %68 : vector<8x1xi32>
    %cst_23 = arith.constant 0.000000e+00 : f32
    %70 = vector.broadcast %cst_23 : f32 to vector<8x1xf32>
    %71 = arith.select %69, %63, %70 : vector<8x1xi1>, vector<8x1xf32>
    %c0_24 = arith.constant 0 : index
    %c0_25 = arith.constant 0 : index
    %72 = vector.load %arg5[%c0_24, %c0_25] : memref<8x1xf32, #tpu.memory_space<vmem>>, vector<8x1xf32>
    tpu.vector_store %arg5[%c0_24, %c0_25], %71 {strides = array<i32>} : memref<8x1xf32, #tpu.memory_space<vmem>>, vector<8x1xf32>,
    return
  }
  func.func @transform_0(%arg0: i32) -> (i32, i32) {
    %c0_i32 = arith.constant 0 : i32
    %c0_i32_0 = arith.constant 0 : i32
    return %arg0, %c0_i32 : i32, i32
  }
  func.func @transform_1(%arg0: i32) -> (i32, i32) {
    %c0_i32 = arith.constant 0 : i32
    %c0_i32_0 = arith.constant 0 : i32
    return %arg0, %c0_i32 : i32, i32
  }
  func.func @transform_2(%arg0: i32) -> (i32, i32) {
    %c0_i32 = arith.constant 0 : i32
    %c0_i32_0 = arith.constant 0 : i32
    return %arg0, %c0_i32 : i32, i32
  }
  func.func @transform_3(%arg0: i32) -> (i32, i32) {
    %c0_i32 = arith.constant 0 : i32
    %c0_i32_0 = arith.constant 0 : i32
    return %arg0, %c0_i32 : i32, i32
  }
  func.func @transform_4(%arg0: i32) -> (i32, i32) {
    %c0_i32 = arith.constant 0 : i32
    %c0_i32_0 = arith.constant 0 : i32
    return %arg0, %c0_i32 : i32, i32
  }
  func.func @transform_5(%arg0: i32) -> (i32, i32) {
    %c0_i32 = arith.constant 0 : i32
    %c0_i32_0 = arith.constant 0 : i32
    return %arg0, %c0_i32 : i32, i32
  }
}

</mosaic_0001>

<llo_original>
// kernel: tpu_custom_call.1
$region0: #{tpu_custom_call.1}
  #allocation0 [shape = 'u32[]', space=smem, size = 0x4, offset = 0x4, fixed_abs, tag = 'smem constant byte address 0x4 - core index']
  #allocation1 [shape = 'u32[144,128]{1,0:T(1,128)}', space=vmem, size = 0x12000, scoped, tag = 'internal scratch']
  %s0 = inlined_call_operand.vmem [shape: f32[8,32], index: 0, kind: input, shape index: {}]
  %s1 = inlined_call_operand.vmem [shape: f32[8,32], index: 1, kind: input, shape index: {}]
  %s2 = inlined_call_operand.vmem [shape: s32[8,1], index: 2, kind: input, shape index: {}]
  %s3 = inlined_call_operand.vmem [shape: f32[8,1], index: 3, kind: input, shape index: {}]
  %s4 = inlined_call_operand.vmem [shape: f32[8,1], index: 4, kind: output, shape index: {0}]
  %s5 = inlined_call_operand.hbm [shape: f32[8,32], index: 5, kind: output, shape index: {1}]
  %6 = xla_tuple %s4, %s5
  %s7 = sld [smem:[#allocation0]]
  $region34: #{tpu_custom_call.1} parent=0
    _
  %s9 = ssub.s32 1, %s7
  %s10 = scalar_select 0, %s9, %s7
  $region1: #{tpu_custom_call.1} parent=0
    #allocation2 [shape = 'u8[4096]{0}', space=vmem, size = 0x1000, scoped, tag = 'output window, operand 1, single buffered']
    #allocation3 [shape = 's32[1]{0}', space=sflag, size = 0x4, scoped, tag = 'scoped memory for tpu_custom_call.1']
    %11 = vsyncpa [#allocation3], 0
    // Predicated region
    $region2: #{tpu_custom_call.1} parent=1 // pred_check
      _
    $region3: #{tpu_custom_call.1} parent=1 // pred_check_branch
      %13 = sbr.rel (0) target = $region5
    $region4: #{tpu_custom_call.1} parent=1 // pred_region
      _
    $region5: #{tpu_custom_call.1} parent=1 // pred_fallthru
      _
    // Predicated region
    $region6: #{tpu_custom_call.1} parent=1 // pred_check
      _
    $region7: #{tpu_custom_call.1} parent=1 // pred_check_branch
      %15 = sbr.rel (0) target = $region9
    $region8: #{tpu_custom_call.1} parent=1 // pred_region
      _
    $region9: #{tpu_custom_call.1} parent=1 // pred_fallthru
      _
    // Predicated region
    $region10: #{tpu_custom_call.1} parent=1 // pred_check
      _
    $region11: #{tpu_custom_call.1} parent=1 // pred_check_branch
      %17 = sbr.rel (0) target = $region13
    $region12: #{tpu_custom_call.1} parent=1 // pred_region
      _
    $region13: #{tpu_custom_call.1} parent=1 // pred_fallthru
      _
    // Predicated region
    $region14: #{tpu_custom_call.1} parent=1 // pred_check
      _
    $region15: #{tpu_custom_call.1} parent=1 // pred_check_branch
      %19 = sbr.rel (0) target = $region17
    $region16: #{tpu_custom_call.1} parent=1 // pred_region
      _
    $region17: #{tpu_custom_call.1} parent=1 // pred_fallthru
      _
    %v20 = vld [vmem:[%s0] sm:$0xff]
    %v21 = vld [vmem:[%s1] sm:$0xff]
    %v22 = vld [vmem:[%s2] sm:$0xff]
    %v23 = vlaneseq
    %v24 = vand.u32 %v23, 127
    %25 = vset.pattern.permute.xlu0 0
    %26 = vperm.xlu0 %25, %v22
    %v27 = vpop.permute.xlu0 %26
    %vm28 = vcmp.eq.s32.totalorder %v24, %v27
    %vm29 = vcmask 261120
    %v30 = vsel %vm29, %v20, -inf
    %31 = vmax.xlane.f32.xlu0 %v30
    %v32 = vpop.xlane.xlu0 %31
    %v33 = vsub.f32 %v20, %v32
    %v34 = vmul.f32 %v33, 1.442695
    %v35 = vpow.pop %v34
    %v36 = vsel %vm29, %v35, 0.0
    %37 = vadd.xlane.f32.xlu0 %v36
    %v38 = vpop.xlane.xlu0 %37
    %v39 = vlog2.pop %v38
    %v40 = vmul.f32 %v39, 0.6931472
    %v41 = vadd.f32 %v40, %v32
    %v42 = vsel %vm29, %v21, -inf
    %43 = vmax.xlane.f32.xlu0 %v42
    %v44 = vpop.xlane.xlu0 %43
    %v45 = vsub.f32 %v21, %v44
    %v46 = vmul.f32 %v45, 1.442695
    %v47 = vpow.pop %v46
    %v48 = vsel %vm29, %v47, 0.0
    %49 = vadd.xlane.f32.xlu0 %v48
    %v50 = vpop.xlane.xlu0 %49
    %v51 = vlog2.pop %v50
    %v52 = vmul.f32 %v51, 0.6931472
    %v53 = vadd.f32 %v52, %v44
    %v54 = vadd.f32 %v20, %v21
    %v55 = vsel %vm29, %v54, -inf
    %56 = vmax.xlane.f32.xlu0 %v55
    %v57 = vpop.xlane.xlu0 %56
    %v58 = vsub.f32 %v54, %v57
    %v59 = vmul.f32 %v58, 1.442695
    %v60 = vpow.pop %v59
    %v61 = vsel %vm29, %v60, 0.0
    %62 = vadd.xlane.f32.xlu0 %v61
    %v63 = vpop.xlane.xlu0 %62
    %v64 = vlog2.pop %v63
    %v65 = vmul.f32 %v64, 0.6931472
    %v66 = vadd.f32 %v65, %v57
    %v67 = vadd.f32 %v41, %v53
    %v68 = vsub.f32 %v54, %v67
    %69 = vst.msk [vmem:[#allocation2] sm:$0xff] %vm29, %v68
    %v70 = vsel %vm28, %v20, 0.0
    %v71 = vsel %vm29, %v70, 0.0
    %72 = vadd.xlane.f32.xlu0 %v71
    %v73 = vpop.xlane.xlu0 %72
    %v74 = vsel %vm28, %v54, 0.0
    %v75 = vsel %vm29, %v74, 0.0
    %76 = vadd.xlane.f32.xlu0 %v75
    %v77 = vpop.xlane.xlu0 %76
    %v78 = vsub.f32 %v41, %v73
    %v79 = vsub.f32 %v66, %v77
    %v80 = vld [vmem:[%s3] sm:$0xff]
    %v81 = vmul.f32 %v79, -1.0
    %v82 = vmul.f32 %v81, 1.442695
    %v83 = vpow.pop %v82
    %v84 = vadd.f32 %v80, 1e-10
    %v85 = vlog2.pop %v84
    %v86 = vmul.f32 %v85, 0.6931472
    %v87 = vmul.f32 %v83, %v86
    %v88 = vmul.f32 %v87, 1.442695
    %v89 = vpow.pop %v88
    %v90 = vmul.f32 %v79, %v89
    %v91 = vsub.f32 1.0, %v89
    %v92 = vmul.f32 %v91, %v78
    %v93 = vadd.f32 %v90, %v92
    %s94 = smul.u32 0, 8
    %v95 = vlaneseq
    %v96 = vshrl.u32 %v95, 7
    %v97 = vstv %s94
    %v98 = vadd.s32 %v97, %v96
    %vm99 = vcmp.lt.s32.totalorder %v98, 8
    %v100 = vsel %vm99, %v93, 0.0
    %vm101 = vcmask 7168
    %102 = vst.msk [vmem:[%s4] sm:$0xff] %vm101, %v100
    // Predicated region
    $region18: #{tpu_custom_call.1} parent=1 // pred_check
      _
    $region19: #{tpu_custom_call.1} parent=1 // pred_check_branch
      %104 = sbr.rel (0) target = $region21
    $region20: #{tpu_custom_call.1} parent=1 // pred_region
      _
    $region21: #{tpu_custom_call.1} parent=1 // pred_fallthru
      _
    // Predicated region
    $region22: #{tpu_custom_call.1} parent=1 // pred_check
      _
    $region23: #{tpu_custom_call.1} parent=1 // pred_check_branch
      %106 = sbr.rel (0) target = $region25
    $region24: #{tpu_custom_call.1} parent=1 // pred_region
      %s108 = ssub.s32 128, 128
      %109 = vsyncadd [#allocation3], %s108
      %s111 = sshll.u32 [#allocation2], 4
      %s112 = int_to_ptr.vmem [resolvable:$true] %s111
      %114 = dma.vmem_to_hbm [thread:$0]  %s112, 128, %s5, [#allocation3]
    $region25: #{tpu_custom_call.1} parent=1 // pred_fallthru
      _
    // Predicated region
    $region26: #{tpu_custom_call.1} parent=1 // pred_check
      _
    $region27: #{tpu_custom_call.1} parent=1 // pred_check_branch
      %116 = sbr.rel (0) target = $region29
    $region28: #{tpu_custom_call.1} parent=1 // pred_region
      _
    $region29: #{tpu_custom_call.1} parent=1 // pred_fallthru
      _
    // Predicated region
    $region30: #{tpu_custom_call.1} parent=1 // pred_check
      _
    $region31: #{tpu_custom_call.1} parent=1 // pred_check_branch
      %118 = sbr.rel (0) target = $region33
    $region32: #{tpu_custom_call.1} parent=1 // pred_region
      %119 = dma.done [#allocation3], 128
    $region33: #{tpu_custom_call.1} parent=1 // pred_fallthru
      _
    %120 = vsyncpa [#allocation3], 1

</llo_original>
